<compile_context>
chip_gen: v6e
topology: v6e:2x2x1
jax: 0.10.0
libtpu: 0.0.40
codegen_flags: <defaults>
</compile_context>

<pallas_src>
import functools

import jax
import jax.numpy as jnp
from jax.experimental import pallas as pl
from jax.experimental.pallas import tpu as pltpu


LANE = 128
TILE_N = 512          # rows per tile; v7x (64 MiB VMEM): 256 recommended
TILE_ELEMWISE = 1024  # rows per tile for pure elementwise kernels


def _round_up(x, m):
    return ((x + m - 1) // m) * m


def _row_tiling(n_rows, tile):
    """Return (block_rows, n_padded, num_tiles)."""
    if n_rows <= tile:
        return n_rows, n_rows, 1          # single full block
    n_pad = _round_up(n_rows, tile)       # tile is a multiple of 8
    return tile, n_pad, n_pad // tile


def _pad_rows(x, n_pad):
    n = x.shape[0]
    if n == n_pad:
        return x
    return jnp.pad(x, ((0, n_pad - n), (0, 0)))


def _pad_lanes(x, c_pad):
    c = x.shape[-1]
    if c == c_pad:
        return x
    return jnp.pad(x, ((0, 0),) * (x.ndim - 1) + ((0, c_pad - c),))


# -------------------------------------------------------------------------
# combination_normal: equ_new[:, 1:4, :] += fc(normal.unsqueeze(-1))
# row-tiled elementwise kernel over the flattened (N*B, C) layout.
# -------------------------------------------------------------------------
def _comb_normal_kernel(equ_ref, nrm_ref, w_ref, out_ref):
    out_ref[...] = equ_ref[...] + nrm_ref[...] * w_ref[...]


def combination_normal_fwd(equ, normals, w, *, tile_m=TILE_ELEMWISE):
    """equ: (N, B, C); normals: (N, 3); w: (C,) = nn.Linear(1, C, bias=False).weight[:, 0]."""
    N, B, C = equ.shape
    nrm_pad = jnp.concatenate(
        [jnp.zeros((N, 1), equ.dtype), normals.astype(equ.dtype)], axis=1)   # (N, B)
    M = N * B
    tm, m_pad, m_tiles = _row_tiling(M, tile_m)
    equ_p = _pad_rows(equ.reshape(M, C), m_pad)
    nrm_p = _pad_rows(nrm_pad.reshape(M, 1), m_pad)
    out = pl.pallas_call(
        _comb_normal_kernel,
        out_shape=jax.ShapeDtypeStruct((m_pad, C), equ.dtype),
        grid=(m_tiles,),
        in_specs=[pl.BlockSpec((tm, C), lambda i: (i, 0)),
                  pl.BlockSpec((tm, 1), lambda i: (i, 0)),
                  pl.BlockSpec((1, C), lambda i: (0, 0))],
        out_specs=pl.BlockSpec((tm, C), lambda i: (i, 0)),
        compiler_params=pltpu.CompilerParams(dimension_semantics=("parallel",)),
    )(equ_p, nrm_p, w.reshape(1, C))
    return out[:M].reshape(N, B, C)


# -------------------------------------------------------------------------
# Fused decoder linear part:
#   equ  = mean_b( (cur_equ[:,b,:] @ Wc) * (last_equ_up[:,b,:] @ Wl) )
#   y    = last_inv_up @ W1 + cur_inv @ W2 + equ @ W3 + bias          (== Linear(concat))
# The per-basis matmuls are block-diagonal weights on the (N, B*C) reshape, the basis
# mean is a stacked-identity matmul -- all lane-dense, no in-kernel slicing.
# -------------------------------------------------------------------------
def _decoder_linear(li, ci, le, ce, wl, wc, sr, w1, w2, w3, b):
    bf = lambda a: a.astype(jnp.bfloat16)
    lef = jnp.dot(bf(le), wl, preferred_element_type=jnp.float32)   # (TN, B*Cc_e)
    cef = jnp.dot(bf(ce), wc, preferred_element_type=jnp.float32)   # (TN, B*Cc_e)
    equ = jnp.dot(bf(lef * cef), sr, preferred_element_type=jnp.float32)   # (TN, Cc_e)
    y = jnp.dot(bf(li), w1, preferred_element_type=jnp.float32)
    y = y + jnp.dot(bf(ci), w2, preferred_element_type=jnp.float32)
    y = y + jnp.dot(bf(equ), w3, preferred_element_type=jnp.float32)
    return y + b


def _decoder_mlp_kernel(li_ref, ci_ref, le_ref, ce_ref,
                        wl_ref, wc_ref, sr_ref, w1_ref, w2_ref, w3_ref, b_ref,
                        y_ref):
    y_ref[...] = _decoder_linear(li_ref[...], ci_ref[...], le_ref[...], ce_ref[...],
                                 wl_ref[...], wc_ref[...], sr_ref[...],
                                 w1_ref[...], w2_ref[...], w3_ref[...], b_ref[...])


def _decoder_mlp_gn_kernel(li_ref, ci_ref, le_ref, ce_ref,
                           wl_ref, wc_ref, sr_ref, w1_ref, w2_ref, w3_ref, b_ref,
                           y_ref, stats_ref, *, n_rows, tile_rows):
    y = _decoder_linear(li_ref[...], ci_ref[...], le_ref[...], ce_ref[...],
                        wl_ref[...], wc_ref[...], sr_ref[...],
                        w1_ref[...], w2_ref[...], w3_ref[...], b_ref[...])
    y_ref[...] = y
    # per-channel sum / sum-of-squares for GroupNorm; stats are over the *whole* cloud
    # (matches nn.GroupNorm applied to (1, C, N)).  Mask rows past the real N.
    row = pl.program_id(0) * tile_rows + jax.lax.broadcasted_iota(
        jnp.int32, (y.shape[0], 1), 0)
    y_m = jnp.where(row < n_rows, y, 0.0)
    csum = jnp.sum(y_m, axis=0, keepdims=True)
    csq = jnp.sum(y_m * y_m, axis=0, keepdims=True)
    srow = jnp.concatenate([csum, csq], axis=-1)            # (1, 2*Cp)
    stats_ref[...] = jnp.broadcast_to(srow, stats_ref.shape)  # (8, 2*Cp), row-replicated


def _gn_apply_kernel(y_ref, sc_ref, sh_ref, out_ref, *, neg_slope):
    v = y_ref[...] * sc_ref[...] + sh_ref[...]
    out_ref[...] = jnp.where(v >= 0.0, v, neg_slope * v)


# -------------------------------------------------------------------------
# decoder.forward
# -------------------------------------------------------------------------
def decoder_forward(p, last_inv, cur_inv, last_equ, cur_equ, upsampling, min_basis,
                    use_group_norm, *, tile_n=TILE_N, eps=1e-5, neg_slope=0.1):
    # nearest_upsample = row gather by nearest-neighbor index (XLA glue, see TODO above)
    li = last_inv[upsampling]                              # (N, Cl_inv)
    le = last_equ[upsampling][:, :min_basis, :]            # (N, B, Cl_e)
    ce = cur_equ[:, :min_basis, :]                         # (N, B, Cc_e)

    N = cur_inv.shape[0]
    B = min_basis
    Cl_e, Cc_e = le.shape[-1], ce.shape[-1]
    Cl_i, Cc_i = li.shape[-1], cur_inv.shape[-1]
    Cout = p['w_mlp'].shape[1]
    Cp = _round_up(Cout, LANE)                             # lane-dense output width

    # --- weight prep (tiny, done once per call) ---
    bf16 = jnp.bfloat16
    eye_b = jnp.eye(B, dtype=jnp.float32)
    wl_bd = (eye_b[:, None, :, None] * p['w_last_equ'][None, :, None, :]
             ).reshape(B * Cl_e, B * Cc_e).astype(bf16)
    wc_bd = (eye_b[:, None, :, None] * p['w_cur_equ'][None, :, None, :]
             ).reshape(B * Cc_e, B * Cc_e).astype(bf16)
    sr = (jnp.tile(jnp.eye(Cc_e, dtype=jnp.float32), (B, 1)) / B).astype(bf16)

    w_mlp = _pad_lanes(p['w_mlp'], Cp)                     # zero-padded extra lanes
    w1 = w_mlp[:Cl_i].astype(bf16)
    w2 = w_mlp[Cl_i:Cl_i + Cc_i].astype(bf16)
    w3 = w_mlp[Cl_i + Cc_i:].astype(bf16)
    bias = _pad_lanes(p['b_mlp'].reshape(1, Cout), Cp)

    # --- activation tiling over N ---
    tn, n_pad, n_tiles = _row_tiling(N, tile_n)
    li_p = _pad_rows(li, n_pad)
    ci_p = _pad_rows(cur_inv, n_pad)
    le_p = _pad_rows(le.reshape(N, B * Cl_e), n_pad)       # contiguous, free reshape
    ce_p = _pad_rows(ce.reshape(N, B * Cc_e), n_pad)

    act_specs = [
        pl.BlockSpec((tn, Cl_i), lambda i: (i, 0)),
        pl.BlockSpec((tn, Cc_i), lambda i: (i, 0)),
        pl.BlockSpec((tn, B * Cl_e), lambda i: (i, 0)),
        pl.BlockSpec((tn, B * Cc_e), lambda i: (i, 0)),
    ]
    w_specs = [
        pl.BlockSpec((B * Cl_e, B * Cc_e), lambda i: (0, 0)),
        pl.BlockSpec((B * Cc_e, B * Cc_e), lambda i: (0, 0)),
        pl.BlockSpec((B * Cc_e, Cc_e), lambda i: (0, 0)),
        pl.BlockSpec((Cl_i, Cp), lambda i: (0, 0)),
        pl.BlockSpec((Cc_i, Cp), lambda i: (0, 0)),
        pl.BlockSpec((Cc_e, Cp), lambda i: (0, 0)),
        pl.BlockSpec((1, Cp), lambda i: (0, 0)),
    ]
    cparams = pltpu.CompilerParams(dimension_semantics=("parallel",))
    args = (li_p, ci_p, le_p, ce_p, wl_bd, wc_bd, sr, w1, w2, w3, bias)

    if not use_group_norm:
        y = pl.pallas_call(
            _decoder_mlp_kernel,
            out_shape=jax.ShapeDtypeStruct((n_pad, Cp), jnp.float32),
            grid=(n_tiles,),
            in_specs=act_specs + w_specs,
            out_specs=pl.BlockSpec((tn, Cp), lambda i: (i, 0)),
            compiler_params=cparams,
        )(*args)
        return y[:N, :Cout]

    kern = functools.partial(_decoder_mlp_gn_kernel, n_rows=N, tile_rows=tn)
    y, stats = pl.pallas_call(
        kern,
        out_shape=(jax.ShapeDtypeStruct((n_pad, Cp), jnp.float32),
                   jax.ShapeDtypeStruct((n_tiles * 8, 2 * Cp), jnp.float32)),
        grid=(n_tiles,),
        in_specs=act_specs + w_specs,
        out_specs=(pl.BlockSpec((tn, Cp), lambda i: (i, 0)),
                   pl.BlockSpec((8, 2 * Cp), lambda i: (i, 0))),
        compiler_params=cparams,
    )(*args)

    # finalize per-cloud GroupNorm statistics (tiny XLA reduction)
    col = stats.reshape(n_tiles, 8, 2 * Cp)[:, 0, :].sum(axis=0)   # (2*Cp,)
    csum = col[:Cp][:Cout]
    csq = col[Cp:][:Cout]
    G = p['num_groups']
    gs = Cout // G
    cnt = float(N * gs)
    mean_g = csum.reshape(G, gs).sum(-1) / cnt
    var_g = jnp.maximum(csq.reshape(G, gs).sum(-1) / cnt - mean_g * mean_g, 0.0)
    inv_g = jax.lax.rsqrt(var_g + eps)
    scale_c = p['gamma'] * jnp.repeat(inv_g, gs)
    shift_c = p['beta'] - jnp.repeat(mean_g, gs) * scale_c
    scale_p = _pad_lanes(scale_c.reshape(1, Cout), Cp)
    shift_p = _pad_lanes(shift_c.reshape(1, Cout), Cp)

    out = pl.pallas_call(
        functools.partial(_gn_apply_kernel, neg_slope=neg_slope),
        out_shape=jax.ShapeDtypeStruct((n_pad, Cp), jnp.float32),
        grid=(n_tiles,),
        in_specs=[pl.BlockSpec((tn, Cp), lambda i: (i, 0)),
                  pl.BlockSpec((1, Cp), lambda i: (0, 0)),
                  pl.BlockSpec((1, Cp), lambda i: (0, 0))],
        out_specs=pl.BlockSpec((tn, Cp), lambda i: (i, 0)),
        compiler_params=cparams,
    )(y, scale_p, shift_p)
    return out[:N, :Cout]


# -------------------------------------------------------------------------
# KPConvFPN.forward (decoder tail + combination_normal)
# -------------------------------------------------------------------------
def kpconv_fpn_forward(params, feats2, feats3, feats4, equ2, equ3, equ4,
                       up1, up2, normals4, equ4_enc):
    # TODO(synk): invencoder encoder stages and cutoff_function / open3d normals are not
    # translatable; their outputs (feats*/equ*) are synthetic inputs here.
    min_basis = 4  # (min(L_in, L_out) + 1) ** 2 with L = 1
    feats_list = []
    equ_list = []

    # self.com4(equ4, normals) -- applied at its true channel width (8*e_c); the
    # subsequent encoder4_2 (undefined invencoder) is skipped.
    equ4_com = combination_normal_fwd(equ4_enc, normals4, params['com4_w'])

    latent_s4 = feats4
    feats_list.append(feats4)
    latent_s3 = decoder_forward(params['decoder3'], latent_s4, feats3, equ4, equ3, up2,
                                min_basis, use_group_norm=True)
    feats_list.append(latent_s3)
    latent_s2 = decoder_forward(params['decoder2'], latent_s3, feats2, equ3, equ2, up1,
                                min_basis, use_group_norm=False)
    feats_list.append(latent_s2)
    equ_list.append(equ4)
    feats_list.reverse()
    return feats_list, equ_list, equ4_com


if __name__ == "__main__":
    key = jax.random.PRNGKey(0)
    init_dim, output_dim, e_c, group_norm = 8, 16, 8, 8
    B = 4                      # (L + 1) ** 2, L = 1
    N4, N3, N2 = 16, 32, 64    # points per pyramid level (coarse -> fine)

    keys = jax.random.split(key, 20)

    def rnd(k, shape, scale=0.02):
        return scale * jax.random.normal(k, shape, dtype=jnp.float32)

    params = {
        # combination_normal(8 * e_c): nn.Linear(1, 64, bias=False)
        'com4_w': rnd(keys[0], (8 * e_c,)),
        # decoder3 = decoder(init_dim*16, init_dim*8, 16*e_c, 8*e_c, init_dim*8, 1, 1, group_norm)
        'decoder3': {
            'w_last_equ': rnd(keys[1], (16 * e_c, 8 * e_c)),
            'w_cur_equ': rnd(keys[2], (8 * e_c, 8 * e_c)),
            'w_mlp': rnd(keys[3], (init_dim * 16 + init_dim * 8 + 8 * e_c, init_dim * 8)),
            'b_mlp': rnd(keys[4], (init_dim * 8,)),
            'gamma': jnp.ones((init_dim * 8,), jnp.float32),
            'beta': jnp.zeros((init_dim * 8,), jnp.float32),
            'num_groups': group_norm,
        },
        # decoder2 = decoder(init_dim*8, init_dim*4, 8*e_c, 4*e_c, output_dim, 1, 1)
        'decoder2': {
            'w_last_equ': rnd(keys[5], (8 * e_c, 4 * e_c)),
            'w_cur_equ': rnd(keys[6], (4 * e_c, 4 * e_c)),
            'w_mlp': rnd(keys[7], (init_dim * 8 + init_dim * 4 + 4 * e_c, output_dim)),
            'b_mlp': rnd(keys[8], (output_dim,)),
        },
    }

    # synthetic encoder outputs (see TODO above)
    feats4 = rnd(keys[9], (N4, init_dim * 16), 1.0)
    feats3 = rnd(keys[10], (N3, init_dim * 8), 1.0)
    feats2 = rnd(keys[11], (N2, init_dim * 4), 1.0)
    equ4 = rnd(keys[12], (N4, B, 16 * e_c), 1.0)
    equ3 = rnd(keys[13], (N3, B, 8 * e_c), 1.0)
    equ2 = rnd(keys[14], (N2, B, 4 * e_c), 1.0)
    up2 = jax.random.randint(keys[15], (N3,), 0, N4)   # upsampling_list[2] (level4 -> level3)
    up1 = jax.random.randint(keys[16], (N2,), 0, N3)   # upsampling_list[1] (level3 -> level2)
    normals4 = rnd(keys[17], (N4, 3), 1.0)
    equ4_enc = rnd(keys[18], (N4, B, 8 * e_c), 1.0)    # equ entering com4 (8*e_c channels)

    feats_list, equ_list, equ4_com = kpconv_fpn_forward(
        params, feats2, feats3, feats4, equ2, equ3, equ4, up1, up2, normals4, equ4_enc)
    jax.block_until_ready((feats_list, equ_list, equ4_com))

    assert feats_list[0].shape == (N2, output_dim)
    assert feats_list[1].shape == (N3, init_dim * 8)
    assert feats_list[2].shape == (N4, init_dim * 16)
    assert equ_list[0].shape == (N4, B, 16 * e_c)
    assert equ4_com.shape == (N4, B, 8 * e_c)
    print("KERNEL_OK")
</pallas_src>

<mosaic_0001>
module attributes {stable_mosaic.version = 11 : i64} {
  func.func @_comb_normal_kernel(%arg0: i32, %arg1: memref<64x64xf32, #tpu.memory_space<vmem>>, %arg2: memref<64x1xf32, #tpu.memory_space<vmem>>, %arg3: memref<1x64xf32, #tpu.memory_space<vmem>>, %arg4: memref<64x64xf32, #tpu.memory_space<vmem>>) attributes {dimension_semantics = [#tpu.dimension_semantics<parallel>], iteration_bounds = array<i64: 1>, scalar_prefetch = 0 : i64, scratch_operands = 0 : i64, tpu.core_type = #tpu.core_type<tc>, window_params = [{transform_indices = @transform_0, window_bounds = array<i64: 64, 64>}, {transform_indices = @transform_1, window_bounds = array<i64: 64, 1>}, {pipeline_mode = #tpu.pipeline_mode<synchronous>, transform_indices = @transform_2, window_bounds = array<i64: 1, 64>}, {transform_indices = @transform_3, window_bounds = array<i64: 64, 64>}]} {
    %c0 = arith.constant 0 : index
    %c0_0 = arith.constant 0 : index
    %0 = vector.load %arg1[%c0, %c0_0] : memref<64x64xf32, #tpu.memory_space<vmem>>, vector<64x64xf32>
    %c0_1 = arith.constant 0 : index
    %c0_2 = arith.constant 0 : index
    %1 = vector.load %arg2[%c0_1, %c0_2] : memref<64x1xf32, #tpu.memory_space<vmem>>, vector<64x1xf32>
    %c0_3 = arith.constant 0 : index
    %c0_4 = arith.constant 0 : index
    %2 = vector.load %arg3[%c0_3, %c0_4] : memref<1x64xf32, #tpu.memory_space<vmem>>, vector<1x64xf32>
    %3 = vector.broadcast %1 : vector<64x1xf32> to vector<64x64xf32>
    %4 = vector.broadcast %2 : vector<1x64xf32> to vector<64x64xf32>
    %5 = arith.mulf %3, %4 : vector<64x64xf32>
    %6 = arith.addf %0, %5 : vector<64x64xf32>
    %c0_5 = arith.constant 0 : index
    %c0_6 = arith.constant 0 : index
    %7 = vector.load %arg4[%c0_5, %c0_6] : memref<64x64xf32, #tpu.memory_space<vmem>>, vector<64x64xf32>
    tpu.vector_store %arg4[%c0_5, %c0_6], %6 {strides = array<i32>} : memref<64x64xf32, #tpu.memory_space<vmem>>, vector<64x64xf32>,
    return
  }
  func.func @transform_0(%arg0: i32) -> (i32, i32) {
    %c0_i32 = arith.constant 0 : i32
    %c0_i32_0 = arith.constant 0 : i32
    return %arg0, %c0_i32 : i32, i32
  }
  func.func @transform_1(%arg0: i32) -> (i32, i32) {
    %c0_i32 = arith.constant 0 : i32
    %c0_i32_0 = arith.constant 0 : i32
    return %arg0, %c0_i32 : i32, i32
  }
  func.func @transform_2(%arg0: i32) -> (i32, i32) {
    %c0_i32 = arith.constant 0 : i32
    %c0_i32_0 = arith.constant 0 : i32
    %c0_i32_1 = arith.constant 0 : i32
    return %c0_i32, %c0_i32_0 : i32, i32
  }
  func.func @transform_3(%arg0: i32) -> (i32, i32) {
    %c0_i32 = arith.constant 0 : i32
    %c0_i32_0 = arith.constant 0 : i32
    return %arg0, %c0_i32 : i32, i32
  }
}

</mosaic_0001>

<llo_original>
// kernel: tpu_custom_call.1
$region0: #{tpu_custom_call.1}
  #allocation0 [shape = 'u32[]', space=smem, size = 0x4, offset = 0x4, fixed_abs, tag = 'smem constant byte address 0x4 - core index']
  #allocation1 [shape = 'u32[144,128]{1,0:T(1,128)}', space=vmem, size = 0x12000, scoped, tag = 'internal scratch']
  %s0 = inlined_call_operand.vmem [shape: f32[64,64], index: 0, kind: input, shape index: {}]
  %s1 = inlined_call_operand.vmem [shape: f32[64,1], index: 1, kind: input, shape index: {}]
  %s2 = inlined_call_operand.vmem [shape: f32[1,64], index: 2, kind: input, shape index: {}]
  %s3 = inlined_call_operand.hbm [shape: f32[64,64], index: 3, kind: output, shape index: {}]
  %s4 = sld [smem:[#allocation0]]
  $region22: #{tpu_custom_call.1} parent=0
    _
  %s6 = ssub.s32 1, %s4
  %s7 = scalar_select 0, %s6, %s4
  $region1: #{tpu_custom_call.1} parent=0
    #allocation2 [shape = 'u8[32768]{0}', space=vmem, size = 0x8000, scoped, tag = 'output window, operand 0, single buffered']
    #allocation3 [shape = 's32[1]{0}', space=sflag, size = 0x4, scoped, tag = 'scoped memory for tpu_custom_call.1']
    %8 = vsyncpa [#allocation3], 0
    // Predicated region
    $region2: #{tpu_custom_call.1} parent=1 // pred_check
      _
    $region3: #{tpu_custom_call.1} parent=1 // pred_check_branch
      %10 = sbr.rel (0) target = $region5
    $region4: #{tpu_custom_call.1} parent=1 // pred_region
      _
    $region5: #{tpu_custom_call.1} parent=1 // pred_fallthru
      _
    // Predicated region
    $region6: #{tpu_custom_call.1} parent=1 // pred_check
      _
    $region7: #{tpu_custom_call.1} parent=1 // pred_check_branch
      %12 = sbr.rel (0) target = $region9
    $region8: #{tpu_custom_call.1} parent=1 // pred_region
      _
    $region9: #{tpu_custom_call.1} parent=1 // pred_fallthru
      _
    // Predicated region
    $region10: #{tpu_custom_call.1} parent=1 // pred_check
      _
    $region11: #{tpu_custom_call.1} parent=1 // pred_check_branch
      %14 = sbr.rel (0) target = $region13
    $region12: #{tpu_custom_call.1} parent=1 // pred_region
      _
    $region13: #{tpu_custom_call.1} parent=1 // pred_fallthru
      _
    %v15 = vld [vmem:[%s0] sm:$0xff]
    %v16 = vld [vmem:[%s0 + $0x8] sm:$0xff]
    %v17 = vld [vmem:[%s0 + $0x10] sm:$0xff]
    %v18 = vld [vmem:[%s0 + $0x18] sm:$0xff]
    %v19 = vld [vmem:[%s0 + $0x20] sm:$0xff]
    %v20 = vld [vmem:[%s0 + $0x28] sm:$0xff]
    %v21 = vld [vmem:[%s0 + $0x30] sm:$0xff]
    %v22 = vld [vmem:[%s0 + $0x38] sm:$0xff]
    %v23 = vld [vmem:[%s1] sm:$0xff]
    %v24 = vld [vmem:[%s1 + $0x8] sm:$0xff]
    %v25 = vld [vmem:[%s1 + $0x10] sm:$0xff]
    %v26 = vld [vmem:[%s1 + $0x18] sm:$0xff]
    %v27 = vld [vmem:[%s1 + $0x20] sm:$0xff]
    %v28 = vld [vmem:[%s1 + $0x28] sm:$0xff]
    %v29 = vld [vmem:[%s1 + $0x30] sm:$0xff]
    %v30 = vld [vmem:[%s1 + $0x38] sm:$0xff]
    %v31 = vld [vmem:[%s2] sm:$0x1]
    %33 = vset.pattern.permute.xlu0 0
    %34 = vperm.xlu0 %33, %v23
    %v35 = vpop.permute.xlu0 %34
    %38 = vset.pattern.permute.xlu0 0
    %39 = vperm.xlu0 %38, %v24
    %v40 = vpop.permute.xlu0 %39
    %43 = vset.pattern.permute.xlu0 0
    %44 = vperm.xlu0 %43, %v25
    %v45 = vpop.permute.xlu0 %44
    %48 = vset.pattern.permute.xlu0 0
    %49 = vperm.xlu0 %48, %v26
    %v50 = vpop.permute.xlu0 %49
    %53 = vset.pattern.permute.xlu0 0
    %54 = vperm.xlu0 %53, %v27
    %v55 = vpop.permute.xlu0 %54
    %58 = vset.pattern.permute.xlu0 0
    %59 = vperm.xlu0 %58, %v28
    %v60 = vpop.permute.xlu0 %59
    %63 = vset.pattern.permute.xlu0 0
    %64 = vperm.xlu0 %63, %v29
    %v65 = vpop.permute.xlu0 %64
    %68 = vset.pattern.permute.xlu0 0
    %69 = vperm.xlu0 %68, %v30
    %v70 = vpop.permute.xlu0 %69
    %v73 = vlaneseq
    %v74 = vshrl.u32 %v73, 7
    %v75 = vsub.s32 0, %v74
    %v76 = vrot.slane %v31, %v75
    %v78 = vmul.f32 %v35, %v76
    %v79 = vmul.f32 %v40, %v76
    %v80 = vmul.f32 %v45, %v76
    %v81 = vmul.f32 %v50, %v76
    %v82 = vmul.f32 %v55, %v76
    %v83 = vmul.f32 %v60, %v76
    %v84 = vmul.f32 %v65, %v76
    %v85 = vmul.f32 %v70, %v76
    %v86 = vadd.f32 %v15, %v78
    %v87 = vadd.f32 %v16, %v79
    %v88 = vadd.f32 %v17, %v80
    %v89 = vadd.f32 %v18, %v81
    %v90 = vadd.f32 %v19, %v82
    %v91 = vadd.f32 %v20, %v83
    %v92 = vadd.f32 %v21, %v84
    %v93 = vadd.f32 %v22, %v85
    %vm94 = vcmask 523264
    %95 = vst.msk [vmem:[#allocation2] sm:$0xff] %vm94, %v86
    %96 = vst.msk [vmem:[#allocation2 + $0x8] sm:$0xff] %vm94, %v87
    %97 = vst.msk [vmem:[#allocation2 + $0x10] sm:$0xff] %vm94, %v88
    %98 = vst.msk [vmem:[#allocation2 + $0x18] sm:$0xff] %vm94, %v89
    %99 = vst.msk [vmem:[#allocation2 + $0x20] sm:$0xff] %vm94, %v90
    %100 = vst.msk [vmem:[#allocation2 + $0x28] sm:$0xff] %vm94, %v91
    %101 = vst.msk [vmem:[#allocation2 + $0x30] sm:$0xff] %vm94, %v92
    %102 = vst.msk [vmem:[#allocation2 + $0x38] sm:$0xff] %vm94, %v93
    // Predicated region
    $region14: #{tpu_custom_call.1} parent=1 // pred_check
      _
    $region15: #{tpu_custom_call.1} parent=1 // pred_check_branch
      %104 = sbr.rel (0) target = $region17
    $region16: #{tpu_custom_call.1} parent=1 // pred_region
      %s106 = ssub.s32 1024, 1024
      %107 = vsyncadd [#allocation3], %s106
      %s108 = sshll.u32 [#allocation2], 4
      %s109 = int_to_ptr.vmem [resolvable:$true] %s108
      %114 = dma.vmem_to_hbm [thread:$0]  %s109, 1024, %s3, [#allocation3], 128, 128, 8
    $region17: #{tpu_custom_call.1} parent=1 // pred_fallthru
      _
    // Predicated region
    $region18: #{tpu_custom_call.1} parent=1 // pred_check
      _
    $region19: #{tpu_custom_call.1} parent=1 // pred_check_branch
      %116 = sbr.rel (0) target = $region21
    $region20: #{tpu_custom_call.1} parent=1 // pred_region
      %117 = dma.done [#allocation3], 1024
    $region21: #{tpu_custom_call.1} parent=1 // pred_fallthru
      _
    %118 = vsyncpa [#allocation3], 1

</llo_original>
